<compile_context>
chip_gen: v7x
topology: tpu7x:2x2x1
jax: 0.10.0
libtpu: 0.0.40
codegen_flags: <defaults>
</compile_context>

<pallas_src>
import functools
from typing import NamedTuple

import jax
import jax.numpy as jnp
from jax.experimental import pallas as pl
from jax.experimental.pallas import tpu as pltpu

LANE = 128
ROW_ALIGN = 16  # multiple-of-16 row tiles for bf16 sublane packing


def _round_up(x, m):
    return -(-x // m) * m


def _cdiv(a, b):
    return -(-a // b)


def _num_tensorcores():
    """2 on dual-TensorCore chips (v7x family), else 1 (v5e/v6e)."""
    try:
        kind = jax.devices()[0].device_kind.lower()
        return 2 if "v7" in kind else 1
    except Exception:  # defensive fallback
        return 1


class DHGCNPreparedParams(NamedTuple):
    w_first: jax.Array  # (in_dim, Dh)             bf16
    b_first: jax.Array  # (1, Dh)                  f32
    w_mid: jax.Array    # (max(num_mid,1), Dh, Dh) bf16
    b_mid: jax.Array    # (max(num_mid,1), 1, Dh)  f32
    w_last: jax.Array   # (Dh, Do)                 bf16
    b_last: jax.Array   # (1, Do)                  f32


def _fused_mlp_kernel(x_ref, wf_ref, bf_ref, wm_ref, bm_ref, wl_ref, bl_ref,
                      o_ref, *, num_mid):
    """Whole Linear+ReLU stack on one resident row tile.

    Matmuls use bf16 operands (MXU-native on v6e/v7x) with f32 accumulation;
    bias add + ReLU stay in f32 (v5e-safe: no bf16 VPU needed).
    """
    # Layer 0: (tm, in_dim) @ (in_dim, Dh) with K at native (unpadded) width.
    h = jnp.dot(x_ref[...].astype(jnp.bfloat16), wf_ref[...],
                preferred_element_type=jnp.float32)
    h = jnp.maximum(h + bf_ref[...], 0.0)
    # Middle layers (static unroll over a trace-time-known, small count).
    for l in range(num_mid):
        h = jnp.dot(h.astype(jnp.bfloat16), wm_ref[l],
                    preferred_element_type=jnp.float32)
        h = jnp.maximum(h + bm_ref[l], 0.0)
    # Last layer: (tm, Dh) @ (Dh, Do).
    h = jnp.dot(h.astype(jnp.bfloat16), wl_ref[...],
                preferred_element_type=jnp.float32)
    h = jnp.maximum(h + bl_ref[...], 0.0)
    o_ref[...] = h.astype(o_ref.dtype)


def _resident_spec(shape):
    """Spec for an operand whose block index is constant across the grid.

    Buffered(1): double-buffering a grid-invariant operand only wastes VMEM.
    """
    zeros = (0,) * len(shape)
    return pl.BlockSpec(shape, lambda i, _z=zeros: _z,
                        pipeline_mode=pl.Buffered(1))


def fused_mlp(x_pad, prep, *, tm, num_mid):
    """Run the whole Linear+ReLU stack in one pallas_call, tiled over rows."""
    M_pad, in_dim = x_pad.shape
    Dh = prep.w_first.shape[1]
    Do = prep.w_last.shape[1]
    nm_blk = prep.w_mid.shape[0]  # >= 1 even when num_mid == 0 (dummy, unused)
    assert M_pad % tm == 0  # guaranteed by the wrapper's padding
    grid = (M_pad // tm,)

    flops = 2 * M_pad * (in_dim * Dh + num_mid * Dh * Dh + Dh * Do)
    bytes_accessed = (
        x_pad.size * 4
        + (prep.w_first.size + prep.w_mid.size + prep.w_last.size) * 2
        + (prep.b_first.size + prep.b_mid.size + prep.b_last.size) * 4
        + M_pad * Do * 4)

    return pl.pallas_call(
        functools.partial(_fused_mlp_kernel, num_mid=num_mid),
        out_shape=jax.ShapeDtypeStruct((M_pad, Do), jnp.float32),
        grid_spec=pltpu.PrefetchScalarGridSpec(
            num_scalar_prefetch=0,
            grid=grid,
            in_specs=[
                pl.BlockSpec((tm, in_dim), lambda i: (i, 0)),  # x row tile (native width)
                _resident_spec((in_dim, Dh)),                  # w_first
                _resident_spec((1, Dh)),                       # b_first
                _resident_spec((nm_blk, Dh, Dh)),              # w_mid stack
                _resident_spec((nm_blk, 1, Dh)),               # b_mid stack
                _resident_spec((Dh, Do)),                      # w_last
                _resident_spec((1, Do)),                       # b_last
            ],
            out_specs=pl.BlockSpec((tm, Do), lambda i: (i, 0)),
        ),
        compiler_params=pltpu.CompilerParams(
            dimension_semantics=("parallel",),
            vmem_limit_bytes=32 * 1024 * 1024,  # tiny footprint; safe on v7x
        ),
        cost_estimate=pl.CostEstimate(
            flops=flops, transcendentals=0, bytes_accessed=bytes_accessed),
    )(x_pad, prep.w_first, prep.b_first, prep.w_mid, prep.b_mid,
      prep.w_last, prep.b_last)


def init_dhgcn_params(key, in_dim, num_hidden, latent_dim, num_layers):
    """layers3 = [Linear(in,hid), Linear(hid,hid)*, Linear(hid,latent)].

    Mirrors create_layers(..., LinearLayer, num_layers, in_dim, latent_dim,
    num_hidden, 1): head_hid = num_hidden / 1 = num_hidden. PyTorch-default
    uniform(-1/sqrt(fan_in), 1/sqrt(fan_in)) init.
    """
    dims = [in_dim] + [num_hidden] * (num_layers - 1) + [latent_dim]
    params = []
    for l in range(num_layers):
        fan_in, fan_out = dims[l], dims[l + 1]
        key, kw, kb = jax.random.split(key, 3)
        bound = 1.0 / float(fan_in) ** 0.5
        w = jax.random.uniform(kw, (fan_in, fan_out), jnp.float32, -bound, bound)
        b = jax.random.uniform(kb, (1, fan_out), jnp.float32, -bound, bound)
        params.append((w, b))
    return params


def prepare_dhgcn_params(params):
    """Pad / stack / cast the Linear weights ONCE (outside the per-call path).

    Per-boundary padded widths: Dh = round_up(num_hidden, 128),
    Do = round_up(latent_dim, 128); the input boundary stays at native width.
    """
    L = len(params)
    assert L >= 2, "DHGCN.create_layers always produces >= 2 layers"
    in_dim = params[0][0].shape[0]
    hidden = params[0][0].shape[1]
    latent = params[-1][0].shape[1]
    num_mid = L - 2
    Dh = _round_up(hidden, LANE)
    Do = _round_up(latent, LANE)

    def pad2(a, r, c):
        return jnp.zeros((r, c), jnp.float32).at[:a.shape[0], :a.shape[1]].set(a)

    w_first = pad2(params[0][0], in_dim, Dh).astype(jnp.bfloat16)
    b_first = pad2(params[0][1], 1, Dh)
    if num_mid > 0:
        w_mid = jnp.stack(
            [pad2(w, Dh, Dh) for (w, _) in params[1:-1]]).astype(jnp.bfloat16)
        b_mid = jnp.stack([pad2(b, 1, Dh) for (_, b) in params[1:-1]])
    else:  # dummy (unused in-kernel when num_mid == 0)
        w_mid = jnp.zeros((1, Dh, Dh), jnp.bfloat16)
        b_mid = jnp.zeros((1, 1, Dh), jnp.float32)
    w_last = pad2(params[-1][0], Dh, Do).astype(jnp.bfloat16)
    b_last = pad2(params[-1][1], 1, Do)

    prep = DHGCNPreparedParams(w_first, b_first, w_mid, b_mid, w_last, b_last)
    meta = dict(latent_dim=latent, num_mid=num_mid)
    return prep, meta


@functools.partial(jax.jit, static_argnames=("latent_dim", "num_mid", "tm_max"))
def dhgcn_forward(prep, inputs, *, latent_dim, num_mid, tm_max=256):
    """Effective DHGCN.forward (norm=Identity, activation=ReLU, head=Identity).

    TODO(synk): gate softmax + GATv2/GAT/KNN/PCA/dropout branches are
    computed-but-discarded in the reference forward; omitted here since they
    do not affect the returned tensor.
    """
    M, _ = inputs.shape

    # Row tiling: one grid step on single-TC chips (grid is a serial loop
    # there); a balanced >=2-way split on dual-TC v7x. Large M falls back to
    # ~tm_max tiles so the working set stays small and DMA/compute overlap.
    n_tc = _num_tensorcores()
    shards = n_tc if M <= tm_max * n_tc else _cdiv(M, tm_max)
    tm = _round_up(max(_cdiv(M, shards), ROW_ALIGN), ROW_ALIGN)
    M_pad = _round_up(M, tm)

    # Pad only rows (zero rows produce relu(bias) garbage that is sliced off);
    # the feature axis stays at its native width.
    x_pad = jnp.pad(inputs.astype(jnp.float32), ((0, M_pad - M), (0, 0)))

    out_pad = fused_mlp(x_pad, prep, tm=tm, num_mid=num_mid)
    return out_pad[:M, :latent_dim]


if __name__ == "__main__":
    # Small config consistent with the module's __init__. N_NODES is chosen
    # NOT to divide the tile alignment so the ragged-row padding path is
    # exercised.
    N_NODES = 200      # number of graph nodes
    IN_DIM = 32        # in_dim
    NUM_HIDDEN = 64    # num_hidden
    LATENT_DIM = 20    # latent_dim (default) = out_dim of last layers3 layer
    NUM_LAYERS = 3     # num_layers

    key = jax.random.PRNGKey(0)
    kx, kp = jax.random.split(key)
    x = jax.random.normal(kx, (N_NODES, IN_DIM), jnp.float32)
    params = init_dhgcn_params(kp, IN_DIM, NUM_HIDDEN, LATENT_DIM, NUM_LAYERS)

    prep, meta = prepare_dhgcn_params(params)   # one-time weight prep
    out = dhgcn_forward(prep, x, latent_dim=meta["latent_dim"],
                        num_mid=meta["num_mid"])
    out = jax.block_until_ready(out)

    # Pure-JAX f32 reference of the same effective forward. The kernel uses
    # bf16 matmul operands with f32 accumulation, hence the loose tolerance.
    h_ref = x
    for (w, b) in params:
        h_ref = jnp.maximum(h_ref @ w + b, 0.0)

    assert out.shape == (N_NODES, LATENT_DIM), out.shape
    max_err = float(jnp.max(jnp.abs(out - h_ref)))
    assert jnp.allclose(out, h_ref, rtol=5e-2, atol=5e-2), (
        f"mismatch vs JAX reference, max |err| = {max_err}")
    print("KERNEL_OK")
</pallas_src>

<mosaic_0001>
module attributes {stable_mosaic.version = 11 : i64} {
  func.func @_fused_mlp_kernel(%arg0: i32, %arg1: memref<208x32xf32, #tpu.memory_space<vmem>>, %arg2: memref<32x128xbf16, #tpu.memory_space<vmem>>, %arg3: memref<1x128xf32, #tpu.memory_space<vmem>>, %arg4: memref<1x128x128xbf16, #tpu.memory_space<vmem>>, %arg5: memref<1x1x128xf32, #tpu.memory_space<vmem>>, %arg6: memref<128x128xbf16, #tpu.memory_space<vmem>>, %arg7: memref<1x128xf32, #tpu.memory_space<vmem>>, %arg8: memref<208x128xf32, #tpu.memory_space<vmem>>) attributes {dimension_semantics = [#tpu.dimension_semantics<parallel>], iteration_bounds = array<i64: 1>, scalar_prefetch = 0 : i64, scratch_operands = 0 : i64, tpu.core_type = #tpu.core_type<tc>, window_params = [{transform_indices = @transform_0, window_bounds = array<i64: 208, 32>}, {pipeline_mode = #tpu.pipeline_mode<synchronous>, transform_indices = @transform_1, window_bounds = array<i64: 32, 128>}, {pipeline_mode = #tpu.pipeline_mode<synchronous>, transform_indices = @transform_2, window_bounds = array<i64: 1, 128>}, {pipeline_mode = #tpu.pipeline_mode<synchronous>, transform_indices = @transform_3, window_bounds = array<i64: 1, 128, 128>}, {pipeline_mode = #tpu.pipeline_mode<synchronous>, transform_indices = @transform_4, window_bounds = array<i64: 1, 1, 128>}, {pipeline_mode = #tpu.pipeline_mode<synchronous>, transform_indices = @transform_5, window_bounds = array<i64: 128, 128>}, {pipeline_mode = #tpu.pipeline_mode<synchronous>, transform_indices = @transform_6, window_bounds = array<i64: 1, 128>}, {transform_indices = @transform_7, window_bounds = array<i64: 208, 128>}]} {
    %c0 = arith.constant 0 : index
    %c0_0 = arith.constant 0 : index
    %0 = vector.load %arg1[%c0, %c0_0] : memref<208x32xf32, #tpu.memory_space<vmem>>, vector<208x32xf32>
    %1 = arith.truncf %0 : vector<208x32xf32> to vector<208x32xbf16>
    %c0_1 = arith.constant 0 : index
    %c0_2 = arith.constant 0 : index
    %2 = vector.load %arg2[%c0_1, %c0_2] : memref<32x128xbf16, #tpu.memory_space<vmem>>, vector<32x128xbf16>
    %cst = arith.constant dense<0.000000e+00> : vector<208x128xf32>
    %3 = tpu.matmul %1, %2, %cst {dimension_numbers = #tpu.dot_dimension_numbers<[1], [0], [0], [1], [0, 0, 1, 1], [], []>} : vector<208x32xbf16>, vector<32x128xbf16>, vector<208x128xf32> -> vector<208x128xf32>
    %c0_3 = arith.constant 0 : index
    %c0_4 = arith.constant 0 : index
    %4 = vector.load %arg3[%c0_3, %c0_4] : memref<1x128xf32, #tpu.memory_space<vmem>>, vector<1x128xf32>
    %5 = vector.broadcast %4 : vector<1x128xf32> to vector<208x128xf32>
    %6 = arith.addf %3, %5 : vector<208x128xf32>
    %cst_5 = arith.constant 0.000000e+00 : f32
    %7 = vector.broadcast %cst_5 : f32 to vector<208x128xf32>
    %8 = arith.maximumf %6, %7 : vector<208x128xf32>
    %9 = arith.truncf %8 : vector<208x128xf32> to vector<208x128xbf16>
    %c0_6 = arith.constant 0 : index
    %c0_7 = arith.constant 0 : index
    %c0_8 = arith.constant 0 : index
    %10 = vector.load %arg4[%c0_6, %c0_7, %c0_8] : memref<1x128x128xbf16, #tpu.memory_space<vmem>>, vector<1x128x128xbf16>
    %11 = vector.shape_cast %10 : vector<1x128x128xbf16> to vector<128x128xbf16>
    %cst_9 = arith.constant dense<0.000000e+00> : vector<208x128xf32>
    %12 = tpu.matmul %9, %11, %cst_9 {dimension_numbers = #tpu.dot_dimension_numbers<[1], [0], [0], [1], [0, 0, 1, 1], [], []>} : vector<208x128xbf16>, vector<128x128xbf16>, vector<208x128xf32> -> vector<208x128xf32>
    %c0_10 = arith.constant 0 : index
    %c0_11 = arith.constant 0 : index
    %c0_12 = arith.constant 0 : index
    %13 = vector.load %arg5[%c0_10, %c0_11, %c0_12] : memref<1x1x128xf32, #tpu.memory_space<vmem>>, vector<1x1x128xf32>
    %14 = vector.shape_cast %13 : vector<1x1x128xf32> to vector<1x128xf32>
    %15 = vector.broadcast %14 : vector<1x128xf32> to vector<208x128xf32>
    %16 = arith.addf %12, %15 : vector<208x128xf32>
    %cst_13 = arith.constant 0.000000e+00 : f32
    %17 = vector.broadcast %cst_13 : f32 to vector<208x128xf32>
    %18 = arith.maximumf %16, %17 : vector<208x128xf32>
    %19 = arith.truncf %18 : vector<208x128xf32> to vector<208x128xbf16>
    %c0_14 = arith.constant 0 : index
    %c0_15 = arith.constant 0 : index
    %20 = vector.load %arg6[%c0_14, %c0_15] : memref<128x128xbf16, #tpu.memory_space<vmem>>, vector<128x128xbf16>
    %cst_16 = arith.constant dense<0.000000e+00> : vector<208x128xf32>
    %21 = tpu.matmul %19, %20, %cst_16 {dimension_numbers = #tpu.dot_dimension_numbers<[1], [0], [0], [1], [0, 0, 1, 1], [], []>} : vector<208x128xbf16>, vector<128x128xbf16>, vector<208x128xf32> -> vector<208x128xf32>
    %c0_17 = arith.constant 0 : index
    %c0_18 = arith.constant 0 : index
    %22 = vector.load %arg7[%c0_17, %c0_18] : memref<1x128xf32, #tpu.memory_space<vmem>>, vector<1x128xf32>
    %23 = vector.broadcast %22 : vector<1x128xf32> to vector<208x128xf32>
    %24 = arith.addf %21, %23 : vector<208x128xf32>
    %cst_19 = arith.constant 0.000000e+00 : f32
    %25 = vector.broadcast %cst_19 : f32 to vector<208x128xf32>
    %26 = arith.maximumf %24, %25 : vector<208x128xf32>
    %c0_20 = arith.constant 0 : index
    %c0_21 = arith.constant 0 : index
    %27 = vector.load %arg8[%c0_20, %c0_21] : memref<208x128xf32, #tpu.memory_space<vmem>>, vector<208x128xf32>
    tpu.vector_store %arg8[%c0_20, %c0_21], %26 {strides = array<i32>} : memref<208x128xf32, #tpu.memory_space<vmem>>, vector<208x128xf32>,
    return
  }
  func.func @transform_0(%arg0: i32) -> (i32, i32) {
    %c0_i32 = arith.constant 0 : i32
    %c0_i32_0 = arith.constant 0 : i32
    return %arg0, %c0_i32 : i32, i32
  }
  func.func @transform_1(%arg0: i32) -> (i32, i32) {
    %c0_i32 = arith.constant 0 : i32
    %c0_i32_0 = arith.constant 0 : i32
    %c0_i32_1 = arith.constant 0 : i32
    return %c0_i32, %c0_i32_0 : i32, i32
  }
  func.func @transform_2(%arg0: i32) -> (i32, i32) {
    %c0_i32 = arith.constant 0 : i32
    %c0_i32_0 = arith.constant 0 : i32
    %c0_i32_1 = arith.constant 0 : i32
    return %c0_i32, %c0_i32_0 : i32, i32
  }
  func.func @transform_3(%arg0: i32) -> (i32, i32, i32) {
    %c0_i32 = arith.constant 0 : i32
    %c0_i32_0 = arith.constant 0 : i32
    %c0_i32_1 = arith.constant 0 : i32
    %c0_i32_2 = arith.constant 0 : i32
    return %c0_i32, %c0_i32_0, %c0_i32_1 : i32, i32, i32
  }
  func.func @transform_4(%arg0: i32) -> (i32, i32, i32) {
    %c0_i32 = arith.constant 0 : i32
    %c0_i32_0 = arith.constant 0 : i32
    %c0_i32_1 = arith.constant 0 : i32
    %c0_i32_2 = arith.constant 0 : i32
    return %c0_i32, %c0_i32_0, %c0_i32_1 : i32, i32, i32
  }
  func.func @transform_5(%arg0: i32) -> (i32, i32) {
    %c0_i32 = arith.constant 0 : i32
    %c0_i32_0 = arith.constant 0 : i32
    %c0_i32_1 = arith.constant 0 : i32
    return %c0_i32, %c0_i32_0 : i32, i32
  }
  func.func @transform_6(%arg0: i32) -> (i32, i32) {
    %c0_i32 = arith.constant 0 : i32
    %c0_i32_0 = arith.constant 0 : i32
    %c0_i32_1 = arith.constant 0 : i32
    return %c0_i32, %c0_i32_0 : i32, i32
  }
  func.func @transform_7(%arg0: i32) -> (i32, i32) {
    %c0_i32 = arith.constant 0 : i32
    %c0_i32_0 = arith.constant 0 : i32
    return %arg0, %c0_i32 : i32, i32
  }
}

</mosaic_0001>

<llo_original>
// kernel: dhgcn_forward.1
$region0: #{dhgcn_forward.1}
  #allocation0 [shape = 'u32[]', space=smem, size = 0x4, offset = 0x4, fixed_abs, tag = 'smem constant byte address 0x4 - core index']
  #allocation1 [shape = 'u32[144,128]{1,0:T(1,128)}', space=vmem, size = 0x12000, scoped, tag = 'internal scratch']
  %s0 = inlined_call_operand.vmem [shape: f32[208,32], index: 0, kind: input, shape index: {}]
  %s1 = inlined_call_operand.vmem [shape: bf16[32,128], index: 1, kind: input, shape index: {}]
  %s2 = inlined_call_operand.vmem [shape: f32[1,128], index: 2, kind: input, shape index: {}]
  %s3 = inlined_call_operand.vmem [shape: bf16[1,128,128], index: 3, kind: input, shape index: {}]
  %s4 = inlined_call_operand.vmem [shape: f32[1,1,128], index: 4, kind: input, shape index: {}]
  %s5 = inlined_call_operand.vmem [shape: bf16[128,128], index: 5, kind: input, shape index: {}]
  %s6 = inlined_call_operand.vmem [shape: f32[1,128], index: 6, kind: input, shape index: {}]
  %s7 = inlined_call_operand.vmem [shape: f32[208,128], index: 7, kind: output, shape index: {}]
  %s8 = sld [smem:[#allocation0]]
  $region38: #{dhgcn_forward.1} parent=0
    _
  %s10 = ssub.s32 1, %s8
  %s11 = scalar_select 0, %s10, %s8
  // Predicated region
  $region2: #{dhgcn_forward.1} parent=0 // pred_check
    _
  $region3: #{dhgcn_forward.1} parent=0 // pred_check_branch
    %13 = sbr.rel (0) target = $region5
  $region4: #{dhgcn_forward.1} parent=0 // pred_region
    _
  $region5: #{dhgcn_forward.1} parent=0 // pred_fallthru
    _
  // Predicated region
  $region6: #{dhgcn_forward.1} parent=0 // pred_check
    _
  $region7: #{dhgcn_forward.1} parent=0 // pred_check_branch
    %15 = sbr.rel (0) target = $region9
  $region8: #{dhgcn_forward.1} parent=0 // pred_region
    _
  $region9: #{dhgcn_forward.1} parent=0 // pred_fallthru
    _
  // Predicated region
  $region10: #{dhgcn_forward.1} parent=0 // pred_check
    _
  $region11: #{dhgcn_forward.1} parent=0 // pred_check_branch
    %17 = sbr.rel (0) target = $region13
  $region12: #{dhgcn_forward.1} parent=0 // pred_region
    _
  $region13: #{dhgcn_forward.1} parent=0 // pred_fallthru
    _
  // Predicated region
  $region14: #{dhgcn_forward.1} parent=0 // pred_check
    _
  $region15: #{dhgcn_forward.1} parent=0 // pred_check_branch
    %19 = sbr.rel (0) target = $region17
  $region16: #{dhgcn_forward.1} parent=0 // pred_region
    _
  $region17: #{dhgcn_forward.1} parent=0 // pred_fallthru
    _
  // Predicated region
  $region18: #{dhgcn_forward.1} parent=0 // pred_check
    _
  $region19: #{dhgcn_forward.1} parent=0 // pred_check_branch
    %21 = sbr.rel (0) target = $region21
  $region20: #{dhgcn_forward.1} parent=0 // pred_region
    _
  $region21: #{dhgcn_forward.1} parent=0 // pred_fallthru
    _
  // Predicated region
  $region22: #{dhgcn_forward.1} parent=0 // pred_check
    _
  $region23: #{dhgcn_forward.1} parent=0 // pred_check_branch
    %23 = sbr.rel (0) target = $region25
  $region24: #{dhgcn_forward.1} parent=0 // pred_region
    _
  $region25: #{dhgcn_forward.1} parent=0 // pred_fallthru
    _
  // Predicated region
  $region26: #{dhgcn_forward.1} parent=0 // pred_check
    _
  $region27: #{dhgcn_forward.1} parent=0 // pred_check_branch
    %25 = sbr.rel (0) target = $region29
  $region28: #{dhgcn_forward.1} parent=0 // pred_region
    _
  $region29: #{dhgcn_forward.1} parent=0 // pred_fallthru
    _
  %v27 = vld [vmem:[%s0] sm:$0xff]
  %v28 = vld [vmem:[%s0 + $0x8] sm:$0xff]
  %v29 = vld [vmem:[%s0 + $0x10] sm:$0xff]
  %v30 = vld [vmem:[%s0 + $0x18] sm:$0xff]
  %v31 = vld [vmem:[%s0 + $0x20] sm:$0xff]
  %v32 = vld [vmem:[%s0 + $0x28] sm:$0xff]
  %v33 = vld [vmem:[%s0 + $0x30] sm:$0xff]
  %v34 = vld [vmem:[%s0 + $0x38] sm:$0xff]
  %v35 = vld [vmem:[%s0 + $0x40] sm:$0xff]
  %v36 = vld [vmem:[%s0 + $0x48] sm:$0xff]
  %v37 = vld [vmem:[%s0 + $0x50] sm:$0xff]
  %v38 = vld [vmem:[%s0 + $0x58] sm:$0xff]
  %v39 = vld [vmem:[%s0 + $0x60] sm:$0xff]
  %v40 = vld [vmem:[%s0 + $0x68] sm:$0xff]
  %v41 = vld [vmem:[%s0 + $0x70] sm:$0xff]
  %v42 = vld [vmem:[%s0 + $0x78] sm:$0xff]
  %v43 = vld [vmem:[%s0 + $0x80] sm:$0xff]
  %v44 = vld [vmem:[%s0 + $0x88] sm:$0xff]
  %v45 = vld [vmem:[%s0 + $0x90] sm:$0xff]
  %v46 = vld [vmem:[%s0 + $0x98] sm:$0xff]
  %v47 = vld [vmem:[%s0 + $0xa0] sm:$0xff]
  %v48 = vld [vmem:[%s0 + $0xa8] sm:$0xff]
  %v49 = vld [vmem:[%s0 + $0xb0] sm:$0xff]
  %v50 = vld [vmem:[%s0 + $0xb8] sm:$0xff]
  %v51 = vld [vmem:[%s0 + $0xc0] sm:$0xff]
  %v52 = vld [vmem:[%s0 + $0xc8] sm:$0xff]
  %v53 = vpack.c.bf16 %v28, %v27
  %v54 = vpack.c.bf16 %v30, %v29
  %v55 = vpack.c.bf16 %v32, %v31
  %v56 = vpack.c.bf16 %v34, %v33
  %v57 = vpack.c.bf16 %v36, %v35
  %v58 = vpack.c.bf16 %v38, %v37
  %v59 = vpack.c.bf16 %v40, %v39
  %v60 = vpack.c.bf16 %v42, %v41
  %v61 = vpack.c.bf16 %v44, %v43
  %v62 = vpack.c.bf16 %v46, %v45
  %v63 = vpack.c.bf16 %v48, %v47
  %v64 = vpack.c.bf16 %v50, %v49
  %v65 = vpack.c.bf16 %v52, %v51
  %v66 = vld [vmem:[%s1] sm:$0xf]
  %v67 = vld [vmem:[%s1 + $0x4] sm:$0xf]
  %v68 = vld [vmem:[%s1 + $0x8] sm:$0xf]
  %v69 = vld [vmem:[%s1 + $0xc] sm:$0xf]
  %v70 = vld [vmem:[%s2] sm:$0x1]
  %v72 = vlaneseq
  %v73 = vshrl.u32 %v72, 7
  %v74 = vsub.s32 0, %v73
  %v75 = vrot.slane %v70, %v74
  %v81 = vunpack.c.l.b16 %v66
  %v82 = vunpack.c.l.b16 %v67
  %v83 = vunpack.c.l.b16 %v68
  %v84 = vunpack.c.l.b16 %v69
  %v85 = vpack.c.b16 %v82, %v81
  %v86 = vpack.c.b16 %v84, %v83
  %vm89 = vcmask 261120
  %v91 = vsel %vm89, %v53, 0
  %v94 = vsel %vm89, %v54, 0
  %v97 = vsel %vm89, %v55, 0
  %v100 = vsel %vm89, %v56, 0
  %v103 = vsel %vm89, %v57, 0
  %v106 = vsel %vm89, %v58, 0
  %v109 = vsel %vm89, %v59, 0
  %v112 = vsel %vm89, %v60, 0
  %v115 = vsel %vm89, %v61, 0
  %v118 = vsel %vm89, %v62, 0
  %v121 = vsel %vm89, %v63, 0
  %v124 = vsel %vm89, %v64, 0
  %v127 = vsel %vm89, %v65, 0
  %129 = vmatprep.subr.bf16.mxu0 0
  %130 = vmatpush1.bf16.msra.mxu0 %v85
  %131 = vmatprep.subr.bf16.mxu0 0
  %132 = vmatpush1.bf16.msra.mxu0 %v86
  %133 = vmatprep.subr.bf16.mxu0 0
  %134 = vmatpush1.bf16.msra.mxu0 0
  %135 = vmatprep.subr.bf16.mxu0 0
  %136 = vmatpush1.bf16.msra.mxu0 0
  %137 = vmatprep.subr.bf16.mxu0 0
  %138 = vmatpush1.bf16.msra.mxu0 0
  %139 = vmatprep.subr.bf16.mxu0 0
  %140 = vmatpush1.bf16.msra.mxu0 0
  %141 = vmatprep.subr.bf16.mxu0 0
  %142 = vmatpush1.bf16.msra.mxu0 0
  %143 = vmatprep.subr.bf16.mxu0 0
  %144 = vmatpush1.bf16.msra.mxu0 0
  %145 = vmatprep.subr.bf16.mxu0 0
  %146 = vmatpush1.bf16.msra.mxu0 0
  %147 = vmatprep.subr.bf16.mxu0 0
  %148 = vmatpush1.bf16.msra.mxu0 0
  %149 = vmatprep.subr.bf16.mxu0 0
  %150 = vmatpush1.bf16.msra.mxu0 0
  %151 = vmatprep.subr.bf16.mxu0 0
  %152 = vmatpush1.bf16.msra.mxu0 0
  %153 = vmatprep.subr.bf16.mxu0 0
  %154 = vmatpush1.bf16.msra.mxu0 0
  %155 = vmatprep.subr.bf16.mxu0 0
  %156 = vmatpush1.bf16.msra.mxu0 0
  %157 = vmatprep.subr.bf16.mxu0 0
  %158 = vmatpush1.bf16.msra.mxu0 0
  %159 = vmatprep.subr.bf16.mxu0 0
  %160 = vmatpush1.bf16.msra.mxu0 0
  %161 = vmatprep.mubr.bf16.mxu0 0
  %162 = vmatmul.mubr.bf16.gmra.mrb[0].mxu0 %v91
  %v163 = vpop.f32.mrb[0].mxu0
  %v164 = vadd.f32 %v75, %v163
  %v165 = vpop.f32.mrb[0].mxu0
  %v166 = vpop.f32.mrb[0].mxu0
  %v167 = vadd.f32 %v75, %v166
  %v168 = vpop.f32.mrb[0].mxu0
  %169 = vmatprep.mubr.bf16.mxu0 0
  %170 = vmatmul.mubr.bf16.gmra.mrb[0].mxu0 %v94
  %v171 = vpop.f32.mrb[0].mxu0
  %v172 = vadd.f32 %v75, %v171
  %v173 = vpop.f32.mrb[0].mxu0
  %v174 = vpop.f32.mrb[0].mxu0
  %v175 = vadd.f32 %v75, %v174
  %v176 = vpop.f32.mrb[0].mxu0
  %177 = vmatprep.mubr.bf16.mxu0 0
  %178 = vmatmul.mubr.bf16.gmra.mrb[0].mxu0 %v97
  %v179 = vpop.f32.mrb[0].mxu0
  %v180 = vadd.f32 %v75, %v179
  %v181 = vpop.f32.mrb[0].mxu0
  %v182 = vpop.f32.mrb[0].mxu0
  %v183 = vadd.f32 %v75, %v182
  %v184 = vpop.f32.mrb[0].mxu0
  %185 = vmatprep.mubr.bf16.mxu0 0
  %186 = vmatmul.mubr.bf16.gmra.mrb[0].mxu0 %v100
  %v187 = vpop.f32.mrb[0].mxu0
  %v188 = vadd.f32 %v75, %v187
  %v189 = vpop.f32.mrb[0].mxu0
  %v190 = vpop.f32.mrb[0].mxu0
  %v191 = vadd.f32 %v75, %v190
  %v192 = vpop.f32.mrb[0].mxu0
  %193 = vmatprep.mubr.bf16.mxu0 0
  %194 = vmatmul.mubr.bf16.gmra.mrb[0].mxu0 %v103
  %v195 = vpop.f32.mrb[0].mxu0
  %v196 = vadd.f32 %v75, %v195
  %v197 = vpop.f32.mrb[0].mxu0
  %v198 = vpop.f32.mrb[0].mxu0
  %v199 = vadd.f32 %v75, %v198
  %v200 = vpop.f32.mrb[0].mxu0
  %201 = vmatprep.mubr.bf16.mxu0 0
  %202 = vmatmul.mubr.bf16.gmra.mrb[0].mxu0 %v106
  %v203 = vpop.f32.mrb[0].mxu0
  %v204 = vadd.f32 %v75, %v203
  %v205 = vpop.f32.mrb[0].mxu0
  %v206 = vpop.f32.mrb[0].mxu0
  %v207 = vadd.f32 %v75, %v206
  %v208 = vpop.f32.mrb[0].mxu0
  %209 = vmatprep.mubr.bf16.mxu0 0
  %210 = vmatmul.mubr.bf16.gmra.mrb[0].mxu0 %v109
  %v211 = vpop.f32.mrb[0].mxu0
  %v212 = vadd.f32 %v75, %v211
  %v213 = vpop.f32.mrb[0].mxu0
  %v214 = vpop.f32.mrb[0].mxu0
  %v215 = vadd.f32 %v75, %v214
  %v216 = vpop.f32.mrb[0].mxu0
  %217 = vmatprep.mubr.bf16.mxu0 0
  %218 = vmatmul.mubr.bf16.gmra.mrb[0].mxu0 %v112
  %v219 = vpop.f32.mrb[0].mxu0
  %v220 = vadd.f32 %v75, %v219
  %v221 = vpop.f32.mrb[0].mxu0
  %v222 = vpop.f32.mrb[0].mxu0
  %v223 = vadd.f32 %v75, %v222
  %v224 = vpop.f32.mrb[0].mxu0
  %225 = vmatprep.mubr.bf16.mxu0 0
  %226 = vmatmul.mubr.bf16.gmra.mrb[0].mxu0 %v115
  %v227 = vpop.f32.mrb[0].mxu0
  %v228 = vadd.f32 %v75, %v227
  %v229 = vpop.f32.mrb[0].mxu0
  %v230 = vpop.f32.mrb[0].mxu0
  %v231 = vadd.f32 %v75, %v230
  %v232 = vpop.f32.mrb[0].mxu0
  %233 = vmatprep.mubr.bf16.mxu0 0
  %234 = vmatmul.mubr.bf16.gmra.mrb[0].mxu0 %v118
  %v235 = vpop.f32.mrb[0].mxu0
  %v236 = vadd.f32 %v75, %v235
  %v237 = vpop.f32.mrb[0].mxu0
  %v238 = vpop.f32.mrb[0].mxu0
  %v239 = vadd.f32 %v75, %v238
  %v240 = vpop.f32.mrb[0].mxu0
  %241 = vmatprep.mubr.bf16.mxu0 0
  %242 = vmatmul.mubr.bf16.gmra.mrb[0].mxu0 %v121
  %v243 = vpop.f32.mrb[0].mxu0
  %v244 = vadd.f32 %v75, %v243
  %v245 = vpop.f32.mrb[0].mxu0
  %v246 = vpop.f32.mrb[0].mxu0
  %v247 = vadd.f32 %v75, %v246
  %v248 = vpop.f32.mrb[0].mxu0
  %249 = vmatprep.mubr.bf16.mxu0 0
  %250 = vmatmul.mubr.bf16.gmra.mrb[0].mxu0 %v124
  %v251 = vpop.f32.mrb[0].mxu0
  %v252 = vadd.f32 %v75, %v251
  %v253 = vpop.f32.mrb[0].mxu0
  %v254 = vpop.f32.mrb[0].mxu0
  %v255 = vadd.f32 %v75, %v254
  %v256 = vpop.f32.mrb[0].mxu0
  %257 = vmatprep.mubr.bf16.mxu0 0
  %258 = vmatmul.mubr.bf16.gmra.mrb[0].mxu0 %v127
  %v259 = vpop.f32.mrb[0].mxu0
  %v260 = vadd.f32 %v75, %v259
  %v261 = vpop.f32.mrb[0].mxu0
  %v262 = vpop.f32.mrb[0].mxu0
  %v263 = vadd.f32 %v75, %v262
  %v264 = vpop.f32.mrb[0].mxu0
  %265 = vdwg.mxu0
  %v266 = vmax.f32 %v164, 0.0
  %v267 = vmax.f32 %v167, 0.0
  %v268 = vmax.f32 %v172, 0.0
  %v269 = vmax.f32 %v175, 0.0
  %v270 = vmax.f32 %v180, 0.0
  %v271 = vmax.f32 %v183, 0.0
  %v272 = vmax.f32 %v188, 0.0
  %v273 = vmax.f32 %v191, 0.0
  %v274 = vmax.f32 %v196, 0.0
  %v275 = vmax.f32 %v199, 0.0
  %v276 = vmax.f32 %v204, 0.0
  %v277 = vmax.f32 %v207, 0.0
  %v278 = vmax.f32 %v212, 0.0
  %v279 = vmax.f32 %v215, 0.0
  %v280 = vmax.f32 %v220, 0.0
  %v281 = vmax.f32 %v223, 0.0
  %v282 = vmax.f32 %v228, 0.0
  %v283 = vmax.f32 %v231, 0.0
  %v284 = vmax.f32 %v236, 0.0
  %v285 = vmax.f32 %v239, 0.0
  %v286 = vmax.f32 %v244, 0.0
  %v287 = vmax.f32 %v247, 0.0
  %v288 = vmax.f32 %v252, 0.0
  %v289 = vmax.f32 %v255, 0.0
  %v290 = vmax.f32 %v260, 0.0
  %v291 = vmax.f32 %v263, 0.0
  %v292 = vpack.c.bf16 %v267, %v266
  %v293 = vpack.c.bf16 %v269, %v268
  %v294 = vpack.c.bf16 %v271, %v270
  %v295 = vpack.c.bf16 %v273, %v272
  %v296 = vpack.c.bf16 %v275, %v274
  %v297 = vpack.c.bf16 %v277, %v276
  %v298 = vpack.c.bf16 %v279, %v278
  %v299 = vpack.c.bf16 %v281, %v280
  %v300 = vpack.c.bf16 %v283, %v282
  %v301 = vpack.c.bf16 %v285, %v284
  %v302 = vpack.c.bf16 %v287, %v286
  %v303 = vpack.c.bf16 %v289, %v288
  %v304 = vpack.c.bf16 %v291, %v290
  %v305 = vld [vmem:[%s3] sm:$0xf]
  %v306 = vld [vmem:[%s3 + $0x4] sm:$0xf]
  %v307 = vld [vmem:[%s3 + $0x8] sm:$0xf]
  %v308 = vld [vmem:[%s3 + $0xc] sm:$0xf]
  %v309 = vld [vmem:[%s3 + $0x10] sm:$0xf]
  %v310 = vld [vmem:[%s3 + $0x14] sm:$0xf]
  %v311 = vld [vmem:[%s3 + $0x18] sm:$0xf]
  %v312 = vld [vmem:[%s3 + $0x1c] sm:$0xf]
  %v313 = vld [vmem:[%s3 + $0x20] sm:$0xf]
  %v314 = vld [vmem:[%s3 + $0x24] sm:$0xf]
  %v315 = vld [vmem:[%s3 + $0x28] sm:$0xf]
  %v316 = vld [vmem:[%s3 + $0x2c] sm:$0xf]
  %v317 = vld [vmem:[%s3 + $0x30] sm:$0xf]
  %v318 = vld [vmem:[%s3 + $0x34] sm:$0xf]
  %v319 = vld [vmem:[%s3 + $0x38] sm:$0xf]
  %v320 = vld [vmem:[%s3 + $0x3c] sm:$0xf]
  %v321 = vld [vmem:[%s4] sm:$0x1]
  %v323 = vlaneseq
  %v324 = vshrl.u32 %v323, 7
  %v325 = vsub.s32 0, %v324
  %v326 = vrot.slane %v321, %v325
  %v344 = vunpack.c.l.b16 %v305
  %v345 = vunpack.c.l.b16 %v306
  %v346 = vunpack.c.l.b16 %v307
  %v347 = vunpack.c.l.b16 %v308
  %v348 = vunpack.c.l.b16 %v309
  %v349 = vunpack.c.l.b16 %v310
  %v350 = vunpack.c.l.b16 %v311
  %v351 = vunpack.c.l.b16 %v312
  %v352 = vunpack.c.l.b16 %v313
  %v353 = vunpack.c.l.b16 %v314
  %v354 = vunpack.c.l.b16 %v315
  %v355 = vunpack.c.l.b16 %v316
  %v356 = vunpack.c.l.b16 %v317
  %v357 = vunpack.c.l.b16 %v318
  %v358 = vunpack.c.l.b16 %v319
  %v359 = vunpack.c.l.b16 %v320
  %v360 = vpack.c.b16 %v345, %v344
  %v361 = vpack.c.b16 %v347, %v346
  %v362 = vpack.c.b16 %v349, %v348
  %v363 = vpack.c.b16 %v351, %v350
  %v364 = vpack.c.b16 %v353, %v352
  %v365 = vpack.c.b16 %v355, %v354
  %v366 = vpack.c.b16 %v357, %v356
  %v367 = vpack.c.b16 %v359, %v358
  %376 = vmatprep.subr.bf16.mxu0 0
  %377 = vmatpush1.bf16.msra.mxu0 %v360
  %378 = vmatprep.subr.bf16.mxu0 0
  %379 = vmatpush1.bf16.msra.mxu0 %v361
  %380 = vmatprep.subr.bf16.mxu0 0
  %381 = vmatpush1.bf16.msra.mxu0 %v362
  %382 = vmatprep.subr.bf16.mxu0 0
  %383 = vmatpush1.bf16.msra.mxu0 %v363
  %384 = vmatprep.subr.bf16.mxu0 0
  %385 = vmatpush1.bf16.msra.mxu0 %v364
  %386 = vmatprep.subr.bf16.mxu0 0
  %387 = vmatpush1.bf16.msra.mxu0 %v365
  %388 = vmatprep.subr.bf16.mxu0 0
  %389 = vmatpush1.bf16.msra.mxu0 %v366
  %390 = vmatprep.subr.bf16.mxu0 0
  %391 = vmatpush1.bf16.msra.mxu0 %v367
  %392 = vmatprep.subr.bf16.mxu0 0
  %393 = vmatpush1.bf16.msra.mxu0 0
  %394 = vmatprep.subr.bf16.mxu0 0
  %395 = vmatpush1.bf16.msra.mxu0 0
  %396 = vmatprep.subr.bf16.mxu0 0
  %397 = vmatpush1.bf16.msra.mxu0 0
  %398 = vmatprep.subr.bf16.mxu0 0
  %399 = vmatpush1.bf16.msra.mxu0 0
  %400 = vmatprep.subr.bf16.mxu0 0
  %401 = vmatpush1.bf16.msra.mxu0 0
  %402 = vmatprep.subr.bf16.mxu0 0
  %403 = vmatpush1.bf16.msra.mxu0 0
  %404 = vmatprep.subr.bf16.mxu0 0
  %405 = vmatpush1.bf16.msra.mxu0 0
  %406 = vmatprep.subr.bf16.mxu0 0
  %407 = vmatpush1.bf16.msra.mxu0 0
  %408 = vmatprep.mubr.bf16.mxu0 0
  %409 = vmatmul.mubr.bf16.gmra.mrb[0].mxu0 %v292
  %v410 = vpop.f32.mrb[0].mxu0
  %v411 = vadd.f32 %v326, %v410
  %v412 = vpop.f32.mrb[0].mxu0
  %v413 = vpop.f32.mrb[0].mxu0
  %v414 = vadd.f32 %v326, %v413
  %v415 = vpop.f32.mrb[0].mxu0
  %416 = vmatprep.mubr.bf16.mxu0 0
  %417 = vmatmul.mubr.bf16.gmra.mrb[0].mxu0 %v293
  %v418 = vpop.f32.mrb[0].mxu0
  %v419 = vadd.f32 %v326, %v418
  %v420 = vpop.f32.mrb[0].mxu0
  %v421 = vpop.f32.mrb[0].mxu0
  %v422 = vadd.f32 %v326, %v421
  %v423 = vpop.f32.mrb[0].mxu0
  %424 = vmatprep.mubr.bf16.mxu0 0
  %425 = vmatmul.mubr.bf16.gmra.mrb[0].mxu0 %v294
  %v426 = vpop.f32.mrb[0].mxu0
  %v427 = vadd.f32 %v326, %v426
  %v428 = vpop.f32.mrb[0].mxu0
  %v429 = vpop.f32.mrb[0].mxu0
  %v430 = vadd.f32 %v326, %v429
  %v431 = vpop.f32.mrb[0].mxu0
  %432 = vmatprep.mubr.bf16.mxu0 0
  %433 = vmatmul.mubr.bf16.gmra.mrb[0].mxu0 %v295
  %v434 = vpop.f32.mrb[0].mxu0
  %v435 = vadd.f32 %v326, %v434
  %v436 = vpop.f32.mrb[0].mxu0
  %v437 = vpop.f32.mrb[0].mxu0
  %v438 = vadd.f32 %v326, %v437
  %v439 = vpop.f32.mrb[0].mxu0
  %440 = vmatprep.mubr.bf16.mxu0 0
  %441 = vmatmul.mubr.bf16.gmra.mrb[0].mxu0 %v296
  %v442 = vpop.f32.mrb[0].mxu0
  %v443 = vadd.f32 %v326, %v442
  %v444 = vpop.f32.mrb[0].mxu0
  %v445 = vpop.f32.mrb[0].mxu0
  %v446 = vadd.f32 %v326, %v445
  %v447 = vpop.f32.mrb[0].mxu0
  %448 = vmatprep.mubr.bf16.mxu0 0
  %449 = vmatmul.mubr.bf16.gmra.mrb[0].mxu0 %v297
  %v450 = vpop.f32.mrb[0].mxu0
  %v451 = vadd.f32 %v326, %v450
  %v452 = vpop.f32.mrb[0].mxu0
  %v453 = vpop.f32.mrb[0].mxu0
  %v454 = vadd.f32 %v326, %v453
  %v455 = vpop.f32.mrb[0].mxu0
  %456 = vmatprep.mubr.bf16.mxu0 0
  %457 = vmatmul.mubr.bf16.gmra.mrb[0].mxu0 %v298
  %v458 = vpop.f32.mrb[0].mxu0
  %v459 = vadd.f32 %v326, %v458
  %v460 = vpop.f32.mrb[0].mxu0
  %v461 = vpop.f32.mrb[0].mxu0
  %v462 = vadd.f32 %v326, %v461
  %v463 = vpop.f32.mrb[0].mxu0
  %464 = vmatprep.mubr.bf16.mxu0 0
  %465 = vmatmul.mubr.bf16.gmra.mrb[0].mxu0 %v299
  %v466 = vpop.f32.mrb[0].mxu0
  %v467 = vadd.f32 %v326, %v466
  %v468 = vpop.f32.mrb[0].mxu0
  %v469 = vpop.f32.mrb[0].mxu0
  %v470 = vadd.f32 %v326, %v469
  %v471 = vpop.f32.mrb[0].mxu0
  %472 = vmatprep.mubr.bf16.mxu0 0
  %473 = vmatmul.mubr.bf16.gmra.mrb[0].mxu0 %v300
  %v474 = vpop.f32.mrb[0].mxu0
  %v475 = vadd.f32 %v326, %v474
  %v476 = vpop.f32.mrb[0].mxu0
  %v477 = vpop.f32.mrb[0].mxu0
  %v478 = vadd.f32 %v326, %v477
  %v479 = vpop.f32.mrb[0].mxu0
  %480 = vmatprep.mubr.bf16.mxu0 0
  %481 = vmatmul.mubr.bf16.gmra.mrb[0].mxu0 %v301
  %v482 = vpop.f32.mrb[0].mxu0
  %v483 = vadd.f32 %v326, %v482
  %v484 = vpop.f32.mrb[0].mxu0
  %v485 = vpop.f32.mrb[0].mxu0
  %v486 = vadd.f32 %v326, %v485
  %v487 = vpop.f32.mrb[0].mxu0
  %488 = vmatprep.mubr.bf16.mxu0 0
  %489 = vmatmul.mubr.bf16.gmra.mrb[0].mxu0 %v302
  %v490 = vpop.f32.mrb[0].mxu0
  %v491 = vadd.f32 %v326, %v490
  %v492 = vpop.f32.mrb[0].mxu0
  %v493 = vpop.f32.mrb[0].mxu0
  %v494 = vadd.f32 %v326, %v493
  %v495 = vpop.f32.mrb[0].mxu0
  %496 = vmatprep.mubr.bf16.mxu0 0
  %497 = vmatmul.mubr.bf16.gmra.mrb[0].mxu0 %v303
  %v498 = vpop.f32.mrb[0].mxu0
  %v499 = vadd.f32 %v326, %v498
  %v500 = vpop.f32.mrb[0].mxu0
  %v501 = vpop.f32.mrb[0].mxu0
  %v502 = vadd.f32 %v326, %v501
  %v503 = vpop.f32.mrb[0].mxu0
  %504 = vmatprep.mubr.bf16.mxu0 0
  %505 = vmatmul.mubr.bf16.gmra.mrb[0].mxu0 %v304
  %v506 = vpop.f32.mrb[0].mxu0
  %v507 = vadd.f32 %v326, %v506
  %v508 = vpop.f32.mrb[0].mxu0
  %v509 = vpop.f32.mrb[0].mxu0
  %v510 = vadd.f32 %v326, %v509
  %v511 = vpop.f32.mrb[0].mxu0
  %512 = vdwg.mxu0
  %v513 = vmax.f32 %v411, 0.0
  %v514 = vmax.f32 %v414, 0.0
  %v515 = vmax.f32 %v419, 0.0
  %v516 = vmax.f32 %v422, 0.0
  %v517 = vmax.f32 %v427, 0.0
  %v518 = vmax.f32 %v430, 0.0
  %v519 = vmax.f32 %v435, 0.0
  %v520 = vmax.f32 %v438, 0.0
  %v521 = vmax.f32 %v443, 0.0
  %v522 = vmax.f32 %v446, 0.0
  %v523 = vmax.f32 %v451, 0.0
  %v524 = vmax.f32 %v454, 0.0
  %v525 = vmax.f32 %v459, 0.0
  %v526 = vmax.f32 %v462, 0.0
  %v527 = vmax.f32 %v467, 0.0
  %v528 = vmax.f32 %v470, 0.0
  %v529 = vmax.f32 %v475, 0.0
  %v530 = vmax.f32 %v478, 0.0
  %v531 = vmax.f32 %v483, 0.0
  %v532 = vmax.f32 %v486, 0.0
  %v533 = vmax.f32 %v491, 0.0
  %v534 = vmax.f32 %v494, 0.0
  %v535 = vmax.f32 %v499, 0.0
  %v536 = vmax.f32 %v502, 0.0
  %v537 = vmax.f32 %v507, 0.0
  %v538 = vmax.f32 %v510, 0.0
  %v539 = vpack.c.bf16 %v514, %v513
  %v540 = vpack.c.bf16 %v516, %v515
  %v541 = vpack.c.bf16 %v518, %v517
  %v542 = vpack.c.bf16 %v520, %v519
  %v543 = vpack.c.bf16 %v522, %v521
  %v544 = vpack.c.bf16 %v524, %v523
  %v545 = vpack.c.bf16 %v526, %v525
  %v546 = vpack.c.bf16 %v528, %v527
  %v547 = vpack.c.bf16 %v530, %v529
  %v548 = vpack.c.bf16 %v532, %v531
  %v549 = vpack.c.bf16 %v534, %v533
  %v550 = vpack.c.bf16 %v536, %v535
  %v551 = vpack.c.bf16 %v538, %v537
  %v552 = vld [vmem:[%s5] sm:$0xf]
  %v553 = vld [vmem:[%s5 + $0x4] sm:$0xf]
  %v554 = vld [vmem:[%s5 + $0x8] sm:$0xf]
  %v555 = vld [vmem:[%s5 + $0xc] sm:$0xf]
  %v556 = vld [vmem:[%s5 + $0x10] sm:$0xf]
  %v557 = vld [vmem:[%s5 + $0x14] sm:$0xf]
  %v558 = vld [vmem:[%s5 + $0x18] sm:$0xf]
  %v559 = vld [vmem:[%s5 + $0x1c] sm:$0xf]
  %v560 = vld [vmem:[%s5 + $0x20] sm:$0xf]
  %v561 = vld [vmem:[%s5 + $0x24] sm:$0xf]
  %v562 = vld [vmem:[%s5 + $0x28] sm:$0xf]
  %v563 = vld [vmem:[%s5 + $0x2c] sm:$0xf]
  %v564 = vld [vmem:[%s5 + $0x30] sm:$0xf]
  %v565 = vld [vmem:[%s5 + $0x34] sm:$0xf]
  %v566 = vld [vmem:[%s5 + $0x38] sm:$0xf]
  %v567 = vld [vmem:[%s5 + $0x3c] sm:$0xf]
  %v568 = vld [vmem:[%s6] sm:$0x1]
  %v570 = vlaneseq
  %v571 = vshrl.u32 %v570, 7
  %v572 = vsub.s32 0, %v571
  %v573 = vrot.slane %v568, %v572
  %v591 = vunpack.c.l.b16 %v552
  %v592 = vunpack.c.l.b16 %v553
  %v593 = vunpack.c.l.b16 %v554
  %v594 = vunpack.c.l.b16 %v555
  %v595 = vunpack.c.l.b16 %v556
  %v596 = vunpack.c.l.b16 %v557
  %v597 = vunpack.c.l.b16 %v558
  %v598 = vunpack.c.l.b16 %v559
  %v599 = vunpack.c.l.b16 %v560
  %v600 = vunpack.c.l.b16 %v561
  %v601 = vunpack.c.l.b16 %v562
  %v602 = vunpack.c.l.b16 %v563
  %v603 = vunpack.c.l.b16 %v564
  %v604 = vunpack.c.l.b16 %v565
  %v605 = vunpack.c.l.b16 %v566
  %v606 = vunpack.c.l.b16 %v567
  %v607 = vpack.c.b16 %v592, %v591
  %v608 = vpack.c.b16 %v594, %v593
  %v609 = vpack.c.b16 %v596, %v595
  %v610 = vpack.c.b16 %v598, %v597
  %v611 = vpack.c.b16 %v600, %v599
  %v612 = vpack.c.b16 %v602, %v601
  %v613 = vpack.c.b16 %v604, %v603
  %v614 = vpack.c.b16 %v606, %v605
  %623 = vmatprep.subr.bf16.mxu0 0
  %624 = vmatpush1.bf16.msra.mxu0 %v607
  %625 = vmatprep.subr.bf16.mxu0 0
  %626 = vmatpush1.bf16.msra.mxu0 %v608
  %627 = vmatprep.subr.bf16.mxu0 0
  %628 = vmatpush1.bf16.msra.mxu0 %v609
  %629 = vmatprep.subr.bf16.mxu0 0
  %630 = vmatpush1.bf16.msra.mxu0 %v610
  %631 = vmatprep.subr.bf16.mxu0 0
  %632 = vmatpush1.bf16.msra.mxu0 %v611
  %633 = vmatprep.subr.bf16.mxu0 0
  %634 = vmatpush1.bf16.msra.mxu0 %v612
  %635 = vmatprep.subr.bf16.mxu0 0
  %636 = vmatpush1.bf16.msra.mxu0 %v613
  %637 = vmatprep.subr.bf16.mxu0 0
  %638 = vmatpush1.bf16.msra.mxu0 %v614
  %639 = vmatprep.subr.bf16.mxu0 0
  %640 = vmatpush1.bf16.msra.mxu0 0
  %641 = vmatprep.subr.bf16.mxu0 0
  %642 = vmatpush1.bf16.msra.mxu0 0
  %643 = vmatprep.subr.bf16.mxu0 0
  %644 = vmatpush1.bf16.msra.mxu0 0
  %645 = vmatprep.subr.bf16.mxu0 0
  %646 = vmatpush1.bf16.msra.mxu0 0
  %647 = vmatprep.subr.bf16.mxu0 0
  %648 = vmatpush1.bf16.msra.mxu0 0
  %649 = vmatprep.subr.bf16.mxu0 0
  %650 = vmatpush1.bf16.msra.mxu0 0
  %651 = vmatprep.subr.bf16.mxu0 0
  %652 = vmatpush1.bf16.msra.mxu0 0
  %653 = vmatprep.subr.bf16.mxu0 0
  %654 = vmatpush1.bf16.msra.mxu0 0
  %655 = vmatprep.mubr.bf16.mxu0 0
  %656 = vmatmul.mubr.bf16.gmra.mrb[0].mxu0 %v539
  %v657 = vpop.f32.mrb[0].mxu0
  %v658 = vadd.f32 %v573, %v657
  %v659 = vpop.f32.mrb[0].mxu0
  %v660 = vpop.f32.mrb[0].mxu0
  %v661 = vadd.f32 %v573, %v660
  %v662 = vpop.f32.mrb[0].mxu0
  %663 = vmatprep.mubr.bf16.mxu0 0
  %664 = vmatmul.mubr.bf16.gmra.mrb[0].mxu0 %v540
  %v665 = vpop.f32.mrb[0].mxu0
  %v666 = vadd.f32 %v573, %v665
  %v667 = vpop.f32.mrb[0].mxu0
  %v668 = vpop.f32.mrb[0].mxu0
  %v669 = vadd.f32 %v573, %v668
  %v670 = vpop.f32.mrb[0].mxu0
  %671 = vmatprep.mubr.bf16.mxu0 0
  %672 = vmatmul.mubr.bf16.gmra.mrb[0].mxu0 %v541
  %v673 = vpop.f32.mrb[0].mxu0
  %v674 = vadd.f32 %v573, %v673
  %v675 = vpop.f32.mrb[0].mxu0
  %v676 = vpop.f32.mrb[0].mxu0
  %v677 = vadd.f32 %v573, %v676
  %v678 = vpop.f32.mrb[0].mxu0
  %679 = vmatprep.mubr.bf16.mxu0 0
  %680 = vmatmul.mubr.bf16.gmra.mrb[0].mxu0 %v542
  %v681 = vpop.f32.mrb[0].mxu0
  %v682 = vadd.f32 %v573, %v681
  %v683 = vpop.f32.mrb[0].mxu0
  %v684 = vpop.f32.mrb[0].mxu0
  %v685 = vadd.f32 %v573, %v684
  %v686 = vpop.f32.mrb[0].mxu0
  %687 = vmatprep.mubr.bf16.mxu0 0
  %688 = vmatmul.mubr.bf16.gmra.mrb[0].mxu0 %v543
  %v689 = vpop.f32.mrb[0].mxu0
  %v690 = vadd.f32 %v573, %v689
  %v691 = vpop.f32.mrb[0].mxu0
  %v692 = vpop.f32.mrb[0].mxu0
  %v693 = vadd.f32 %v573, %v692
  %v694 = vpop.f32.mrb[0].mxu0
  %695 = vmatprep.mubr.bf16.mxu0 0
  %696 = vmatmul.mubr.bf16.gmra.mrb[0].mxu0 %v544
  %v697 = vpop.f32.mrb[0].mxu0
  %v698 = vadd.f32 %v573, %v697
  %v699 = vpop.f32.mrb[0].mxu0
  %v700 = vpop.f32.mrb[0].mxu0
  %v701 = vadd.f32 %v573, %v700
  %v702 = vpop.f32.mrb[0].mxu0
  %703 = vmatprep.mubr.bf16.mxu0 0
  %704 = vmatmul.mubr.bf16.gmra.mrb[0].mxu0 %v545
  %v705 = vpop.f32.mrb[0].mxu0
  %v706 = vadd.f32 %v573, %v705
  %v707 = vpop.f32.mrb[0].mxu0
  %v708 = vpop.f32.mrb[0].mxu0
  %v709 = vadd.f32 %v573, %v708
  %v710 = vpop.f32.mrb[0].mxu0
  %711 = vmatprep.mubr.bf16.mxu0 0
  %712 = vmatmul.mubr.bf16.gmra.mrb[0].mxu0 %v546
  %v713 = vpop.f32.mrb[0].mxu0
  %v714 = vadd.f32 %v573, %v713
  %v715 = vpop.f32.mrb[0].mxu0
  %v716 = vpop.f32.mrb[0].mxu0
  %v717 = vadd.f32 %v573, %v716
  %v718 = vpop.f32.mrb[0].mxu0
  %719 = vmatprep.mubr.bf16.mxu0 0
  %720 = vmatmul.mubr.bf16.gmra.mrb[0].mxu0 %v547
  %v721 = vpop.f32.mrb[0].mxu0
  %v722 = vadd.f32 %v573, %v721
  %v723 = vpop.f32.mrb[0].mxu0
  %v724 = vpop.f32.mrb[0].mxu0
  %v725 = vadd.f32 %v573, %v724
  %v726 = vpop.f32.mrb[0].mxu0
  %727 = vmatprep.mubr.bf16.mxu0 0
  %728 = vmatmul.mubr.bf16.gmra.mrb[0].mxu0 %v548
  %v729 = vpop.f32.mrb[0].mxu0
  %v730 = vadd.f32 %v573, %v729
  %v731 = vpop.f32.mrb[0].mxu0
  %v732 = vpop.f32.mrb[0].mxu0
  %v733 = vadd.f32 %v573, %v732
  %v734 = vpop.f32.mrb[0].mxu0
  %735 = vmatprep.mubr.bf16.mxu0 0
  %736 = vmatmul.mubr.bf16.gmra.mrb[0].mxu0 %v549
  %v737 = vpop.f32.mrb[0].mxu0
  %v738 = vadd.f32 %v573, %v737
  %v739 = vpop.f32.mrb[0].mxu0
  %v740 = vpop.f32.mrb[0].mxu0
  %v741 = vadd.f32 %v573, %v740
  %v742 = vpop.f32.mrb[0].mxu0
  %743 = vmatprep.mubr.bf16.mxu0 0
  %744 = vmatmul.mubr.bf16.gmra.mrb[0].mxu0 %v550
  %v745 = vpop.f32.mrb[0].mxu0
  %v746 = vadd.f32 %v573, %v745
  %v747 = vpop.f32.mrb[0].mxu0
  %v748 = vpop.f32.mrb[0].mxu0
  %v749 = vadd.f32 %v573, %v748
  %v750 = vpop.f32.mrb[0].mxu0
  %751 = vmatprep.mubr.bf16.mxu0 0
  %752 = vmatmul.mubr.bf16.gmra.mrb[0].mxu0 %v551
  %v753 = vpop.f32.mrb[0].mxu0
  %v754 = vadd.f32 %v573, %v753
  %v755 = vpop.f32.mrb[0].mxu0
  %v756 = vpop.f32.mrb[0].mxu0
  %v757 = vadd.f32 %v573, %v756
  %v758 = vpop.f32.mrb[0].mxu0
  %759 = vdwg.mxu0
  %v760 = vmax.f32 %v658, 0.0
  %v761 = vmax.f32 %v661, 0.0
  %v762 = vmax.f32 %v666, 0.0
  %v763 = vmax.f32 %v669, 0.0
  %v764 = vmax.f32 %v674, 0.0
  %v765 = vmax.f32 %v677, 0.0
  %v766 = vmax.f32 %v682, 0.0
  %v767 = vmax.f32 %v685, 0.0
  %v768 = vmax.f32 %v690, 0.0
  %v769 = vmax.f32 %v693, 0.0
  %v770 = vmax.f32 %v698, 0.0
  %v771 = vmax.f32 %v701, 0.0
  %v772 = vmax.f32 %v706, 0.0
  %v773 = vmax.f32 %v709, 0.0
  %v774 = vmax.f32 %v714, 0.0
  %v775 = vmax.f32 %v717, 0.0
  %v776 = vmax.f32 %v722, 0.0
  %v777 = vmax.f32 %v725, 0.0
  %v778 = vmax.f32 %v730, 0.0
  %v779 = vmax.f32 %v733, 0.0
  %v780 = vmax.f32 %v738, 0.0
  %v781 = vmax.f32 %v741, 0.0
  %v782 = vmax.f32 %v746, 0.0
  %v783 = vmax.f32 %v749, 0.0
  %v784 = vmax.f32 %v754, 0.0
  %v785 = vmax.f32 %v757, 0.0
  %786 = vst [vmem:[%s7] sm:$0xff] %v760
  %787 = vst [vmem:[%s7 + $0x8] sm:$0xff] %v761
  %788 = vst [vmem:[%s7 + $0x10] sm:$0xff] %v762
  %789 = vst [vmem:[%s7 + $0x18] sm:$0xff] %v763
  %790 = vst [vmem:[%s7 + $0x20] sm:$0xff] %v764
  %791 = vst [vmem:[%s7 + $0x28] sm:$0xff] %v765
  %792 = vst [vmem:[%s7 + $0x30] sm:$0xff] %v766
  %793 = vst [vmem:[%s7 + $0x38] sm:$0xff] %v767
  %794 = vst [vmem:[%s7 + $0x40] sm:$0xff] %v768
  %795 = vst [vmem:[%s7 + $0x48] sm:$0xff] %v769
  %796 = vst [vmem:[%s7 + $0x50] sm:$0xff] %v770
  %797 = vst [vmem:[%s7 + $0x58] sm:$0xff] %v771
  %798 = vst [vmem:[%s7 + $0x60] sm:$0xff] %v772
  %799 = vst [vmem:[%s7 + $0x68] sm:$0xff] %v773
  %800 = vst [vmem:[%s7 + $0x70] sm:$0xff] %v774
  %801 = vst [vmem:[%s7 + $0x78] sm:$0xff] %v775
  %802 = vst [vmem:[%s7 + $0x80] sm:$0xff] %v776
  %803 = vst [vmem:[%s7 + $0x88] sm:$0xff] %v777
  %804 = vst [vmem:[%s7 + $0x90] sm:$0xff] %v778
  %805 = vst [vmem:[%s7 + $0x98] sm:$0xff] %v779
  %806 = vst [vmem:[%s7 + $0xa0] sm:$0xff] %v780
  %807 = vst [vmem:[%s7 + $0xa8] sm:$0xff] %v781
  %808 = vst [vmem:[%s7 + $0xb0] sm:$0xff] %v782
  %809 = vst [vmem:[%s7 + $0xb8] sm:$0xff] %v783
  %810 = vst [vmem:[%s7 + $0xc0] sm:$0xff] %v784
  %811 = vst [vmem:[%s7 + $0xc8] sm:$0xff] %v785
  // Predicated region
  $region30: #{dhgcn_forward.1} parent=0 // pred_check
    _
  $region31: #{dhgcn_forward.1} parent=0 // pred_check_branch
    %813 = sbr.rel (0) target = $region33
  $region32: #{dhgcn_forward.1} parent=0 // pred_region
    _
  $region33: #{dhgcn_forward.1} parent=0 // pred_fallthru
    _
  // Predicated region
  $region34: #{dhgcn_forward.1} parent=0 // pred_check
    _
  $region35: #{dhgcn_forward.1} parent=0 // pred_check_branch
    %815 = sbr.rel (0) target = $region37
  $region36: #{dhgcn_forward.1} parent=0 // pred_region
    _
  $region37: #{dhgcn_forward.1} parent=0 // pred_fallthru
    _

</llo_original>
